<compile_context>
chip_gen: v7x
topology: tpu7x:2x2x1
jax: 0.10.0
libtpu: 0.0.40
codegen_flags: <defaults>
</compile_context>

<pallas_src>
import functools

import jax
import jax.numpy as jnp
from jax.experimental import pallas as pl
from jax.experimental.pallas import tpu as pltpu

LANE = 128      # TPU lane width (last dim)
SUBLANE = 8     # TPU sublane width (second-to-last dim, f32)


def _round_up(n, m):
    return ((n + m - 1) // m) * m


def _cdiv(a, b):
    return -(-a // b)


def _mlp_kernel(x_ref,
                w1_ref, b1_ref,
                w2_ref, b2_ref,
                w3_ref, b3_ref,
                w4_ref, b4_ref,
                o_ref):
    """Fused 4-layer MLP on one (tile_b, ndIn_p) batch block.

    Layer 1 runs in f32 (tiny K), layers 2-4 use bf16 MXU inputs with f32
    accumulation; bias-add / ReLU run in f32 on the VPU (safe on v5e).
    Only the narrow (tile_b, ndOut_p) output slice is written back.
    """
    # Layer 1: K = ndIn padded to 8 -> negligible MXU work, keep f32.
    h = jnp.dot(x_ref[...], w1_ref[...], preferred_element_type=jnp.float32)
    h = jnp.maximum(h + b1_ref[...], 0.0)

    # Layers 2-3: bf16 MXU inputs, f32 accumulation.
    h = jnp.dot(h.astype(jnp.bfloat16), w2_ref[...],
                preferred_element_type=jnp.float32)
    h = jnp.maximum(h + b2_ref[...], 0.0)

    h = jnp.dot(h.astype(jnp.bfloat16), w3_ref[...],
                preferred_element_type=jnp.float32)
    h = jnp.maximum(h + b3_ref[...], 0.0)

    # Layer 4: MXU-aligned (N=128) matmul, then narrow f32 store of the first
    # ndOut_p columns only (~16x less HBM writeback than a 128-wide store).
    out = jnp.dot(h.astype(jnp.bfloat16), w4_ref[...],
                  preferred_element_type=jnp.float32) + b4_ref[...]
    o_ref[...] = out[:, :o_ref.shape[-1]].astype(o_ref.dtype)


@functools.partial(jax.jit, static_argnames=("tile_b",))
def neural_network_forward(x, params, *, tile_b=1024):
    """Fused MLP forward. params is a flat tuple
    (w1, b1, w2, b2, w3, b3, w4, b4) with wK: [in, out] f32, bK: [1, out] f32
    (wK is torch's Linear weight transposed so the kernel does x @ W + b)."""
    B, nd_in = x.shape
    nd_out = params[-1].shape[-1]
    num_neurons = params[0].shape[-1]

    nd_in_p = _round_up(nd_in, SUBLANE)     # 4  -> 8   : near-native x width
    nh_p = _round_up(num_neurons, LANE)     # 32 -> 128 : MXU lane width
    nd_out_p = _round_up(nd_out, SUBLANE)   # 3  -> 8   : narrow f32 writeback

    def pad2(a, rows, cols):
        return jnp.pad(a, ((0, rows - a.shape[0]), (0, cols - a.shape[1])))

    w1, b1, w2, b2, w3, b3, w4, b4 = params
    # Zero padding is exact: padded rows/cols contribute 0 and ReLU(0) = 0.
    padded_params = [
        pad2(w1, nd_in_p, nh_p).astype(jnp.float32),   # layer 1 stays f32
        pad2(b1, 1, nh_p).astype(jnp.float32),
        pad2(w2, nh_p, nh_p).astype(jnp.bfloat16),
        pad2(b2, 1, nh_p).astype(jnp.float32),
        pad2(w3, nh_p, nh_p).astype(jnp.bfloat16),
        pad2(b3, 1, nh_p).astype(jnp.float32),
        pad2(w4, nh_p, nh_p).astype(jnp.bfloat16),     # N padded to 128 (aligned matmul)
        pad2(b4, 1, nh_p).astype(jnp.float32),
    ]

    # --- batch tiling ------------------------------------------------------
    # Bounded over-padding (<= ~8 extra rows per grid step) and >= 2 grid
    # steps whenever B allows, so v7x can shard the parallel axis across its
    # 2 TensorCores (harmless on single-TC v5e/v6e).
    B_p8 = _round_up(max(B, 1), SUBLANE)
    n_steps = max(1, _cdiv(B_p8, tile_b))
    if B_p8 >= 2 * SUBLANE:
        n_steps = max(n_steps, 2)
    tb = _round_up(_cdiv(B_p8, n_steps), SUBLANE)
    B_pad = n_steps * tb

    x_p = pad2(x, B_pad, nd_in_p).astype(jnp.float32)

    # x / out stream over the batch grid; weights & biases are VMEM-resident
    # across all grid iterations (index_map constant (0, 0)).
    x_spec = pl.BlockSpec((tb, nd_in_p), lambda i: (i, 0))
    out_spec = pl.BlockSpec((tb, nd_out_p), lambda i: (i, 0))
    param_specs = [pl.BlockSpec(p.shape, lambda i: (0, 0))
                   for p in padded_params]

    # Advisory cost estimate (logical FLOPs, actual bytes moved).
    flops = 2 * B * (nd_in * num_neurons
                     + 2 * num_neurons * num_neurons
                     + num_neurons * nd_out)
    bytes_accessed = (int(x_p.size) * 4
                      + sum(int(p.size) * p.dtype.itemsize
                            for p in padded_params)
                      + B_pad * nd_out_p * 4)
    cost = pl.CostEstimate(flops=flops, transcendentals=0,
                           bytes_accessed=bytes_accessed)

    out_padded = pl.pallas_call(
        _mlp_kernel,
        out_shape=jax.ShapeDtypeStruct((B_pad, nd_out_p), jnp.float32),
        grid=(n_steps,),
        in_specs=[x_spec] + param_specs,
        out_specs=out_spec,
        compiler_params=pltpu.CompilerParams(
            dimension_semantics=("parallel",),        # megacore / dual-TC
            vmem_limit_bytes=32 * 1024 * 1024,        # explicit, v7x-safe
        ),
        cost_estimate=cost,
    )(x_p, *padded_params)

    return out_padded[:B, :nd_out]


def init_params(key, input_dim, output_dim, num_neurons):
    """Deterministic torch.nn.Linear-style init (uniform +/- 1/sqrt(fan_in)).
    Weights are returned as [in, out] (already transposed for x @ W)."""
    dims = [(input_dim, num_neurons),
            (num_neurons, num_neurons),
            (num_neurons, num_neurons),
            (num_neurons, output_dim)]
    params = []
    for (fan_in, fan_out) in dims:
        key, kw, kb = jax.random.split(key, 3)
        bound = 1.0 / jnp.sqrt(jnp.float32(fan_in))
        w = jax.random.uniform(kw, (fan_in, fan_out), jnp.float32, -bound, bound)
        b = jax.random.uniform(kb, (1, fan_out), jnp.float32, -bound, bound)
        params += [w, b]
    return tuple(params)


def reference_forward(x, params):
    w1, b1, w2, b2, w3, b3, w4, b4 = params
    h = jnp.maximum(x @ w1 + b1, 0.0)
    h = jnp.maximum(h @ w2 + b2, 0.0)
    h = jnp.maximum(h @ w3 + b3, 0.0)
    return h @ w4 + b4


if __name__ == "__main__":
    # NeuralNetwork(inputDim=4, outputDim=3, numNeurons=32), batch of 8.
    input_dim, output_dim, num_neurons = 4, 3, 32
    batch = 8

    key = jax.random.PRNGKey(0)
    key, kx = jax.random.split(key)
    x = jax.random.normal(kx, (batch, input_dim), dtype=jnp.float32)
    params = init_params(key, input_dim, output_dim, num_neurons)

    out = neural_network_forward(x, params)
    out = jax.block_until_ready(out)

    ref = reference_forward(x, params)   # pure f32 reference
    assert out.shape == (batch, output_dim)
    # Layer 1 is f32; layers 2-4 use bf16 matmul inputs with f32 accumulation.
    assert jnp.allclose(out, ref, atol=3e-2, rtol=3e-2)

    print("KERNEL_OK")
</pallas_src>

<mosaic_0001>
module attributes {stable_mosaic.version = 11 : i64} {
  func.func @_mlp_kernel(%arg0: i32, %arg1: memref<8x8xf32, #tpu.memory_space<vmem>>, %arg2: memref<8x128xf32, #tpu.memory_space<vmem>>, %arg3: memref<1x128xf32, #tpu.memory_space<vmem>>, %arg4: memref<128x128xbf16, #tpu.memory_space<vmem>>, %arg5: memref<1x128xf32, #tpu.memory_space<vmem>>, %arg6: memref<128x128xbf16, #tpu.memory_space<vmem>>, %arg7: memref<1x128xf32, #tpu.memory_space<vmem>>, %arg8: memref<128x128xbf16, #tpu.memory_space<vmem>>, %arg9: memref<1x128xf32, #tpu.memory_space<vmem>>, %arg10: memref<8x8xf32, #tpu.memory_space<vmem>>) attributes {dimension_semantics = [#tpu.dimension_semantics<parallel>], iteration_bounds = array<i64: 1>, scalar_prefetch = 0 : i64, scratch_operands = 0 : i64, tpu.core_type = #tpu.core_type<tc>, window_params = [{transform_indices = @transform_0, window_bounds = array<i64: 8, 8>}, {pipeline_mode = #tpu.pipeline_mode<synchronous>, transform_indices = @transform_1, window_bounds = array<i64: 8, 128>}, {pipeline_mode = #tpu.pipeline_mode<synchronous>, transform_indices = @transform_2, window_bounds = array<i64: 1, 128>}, {pipeline_mode = #tpu.pipeline_mode<synchronous>, transform_indices = @transform_3, window_bounds = array<i64: 128, 128>}, {pipeline_mode = #tpu.pipeline_mode<synchronous>, transform_indices = @transform_4, window_bounds = array<i64: 1, 128>}, {pipeline_mode = #tpu.pipeline_mode<synchronous>, transform_indices = @transform_5, window_bounds = array<i64: 128, 128>}, {pipeline_mode = #tpu.pipeline_mode<synchronous>, transform_indices = @transform_6, window_bounds = array<i64: 1, 128>}, {pipeline_mode = #tpu.pipeline_mode<synchronous>, transform_indices = @transform_7, window_bounds = array<i64: 128, 128>}, {pipeline_mode = #tpu.pipeline_mode<synchronous>, transform_indices = @transform_8, window_bounds = array<i64: 1, 128>}, {transform_indices = @transform_9, window_bounds = array<i64: 8, 8>}]} {
    %c0 = arith.constant 0 : index
    %c0_0 = arith.constant 0 : index
    %0 = vector.load %arg1[%c0, %c0_0] : memref<8x8xf32, #tpu.memory_space<vmem>>, vector<8x8xf32>
    %c0_1 = arith.constant 0 : index
    %c0_2 = arith.constant 0 : index
    %1 = vector.load %arg2[%c0_1, %c0_2] : memref<8x128xf32, #tpu.memory_space<vmem>>, vector<8x128xf32>
    %cst = arith.constant dense<0.000000e+00> : vector<8x128xf32>
    %2 = tpu.matmul %0, %1, %cst {dimension_numbers = #tpu.dot_dimension_numbers<[1], [0], [0], [1], [0, 0, 1, 1], [], []>} : vector<8x8xf32>, vector<8x128xf32>, vector<8x128xf32> -> vector<8x128xf32>
    %c0_3 = arith.constant 0 : index
    %c0_4 = arith.constant 0 : index
    %3 = vector.load %arg3[%c0_3, %c0_4] : memref<1x128xf32, #tpu.memory_space<vmem>>, vector<1x128xf32>
    %4 = vector.broadcast %3 : vector<1x128xf32> to vector<8x128xf32>
    %5 = arith.addf %2, %4 : vector<8x128xf32>
    %cst_5 = arith.constant 0.000000e+00 : f32
    %6 = vector.broadcast %cst_5 : f32 to vector<8x128xf32>
    %7 = arith.maximumf %5, %6 : vector<8x128xf32>
    %8 = arith.truncf %7 : vector<8x128xf32> to vector<8x128xbf16>
    %c0_6 = arith.constant 0 : index
    %c0_7 = arith.constant 0 : index
    %9 = vector.load %arg4[%c0_6, %c0_7] : memref<128x128xbf16, #tpu.memory_space<vmem>>, vector<128x128xbf16>
    %cst_8 = arith.constant dense<0.000000e+00> : vector<8x128xf32>
    %10 = tpu.matmul %8, %9, %cst_8 {dimension_numbers = #tpu.dot_dimension_numbers<[1], [0], [0], [1], [0, 0, 1, 1], [], []>} : vector<8x128xbf16>, vector<128x128xbf16>, vector<8x128xf32> -> vector<8x128xf32>
    %c0_9 = arith.constant 0 : index
    %c0_10 = arith.constant 0 : index
    %11 = vector.load %arg5[%c0_9, %c0_10] : memref<1x128xf32, #tpu.memory_space<vmem>>, vector<1x128xf32>
    %12 = vector.broadcast %11 : vector<1x128xf32> to vector<8x128xf32>
    %13 = arith.addf %10, %12 : vector<8x128xf32>
    %cst_11 = arith.constant 0.000000e+00 : f32
    %14 = vector.broadcast %cst_11 : f32 to vector<8x128xf32>
    %15 = arith.maximumf %13, %14 : vector<8x128xf32>
    %16 = arith.truncf %15 : vector<8x128xf32> to vector<8x128xbf16>
    %c0_12 = arith.constant 0 : index
    %c0_13 = arith.constant 0 : index
    %17 = vector.load %arg6[%c0_12, %c0_13] : memref<128x128xbf16, #tpu.memory_space<vmem>>, vector<128x128xbf16>
    %cst_14 = arith.constant dense<0.000000e+00> : vector<8x128xf32>
    %18 = tpu.matmul %16, %17, %cst_14 {dimension_numbers = #tpu.dot_dimension_numbers<[1], [0], [0], [1], [0, 0, 1, 1], [], []>} : vector<8x128xbf16>, vector<128x128xbf16>, vector<8x128xf32> -> vector<8x128xf32>
    %c0_15 = arith.constant 0 : index
    %c0_16 = arith.constant 0 : index
    %19 = vector.load %arg7[%c0_15, %c0_16] : memref<1x128xf32, #tpu.memory_space<vmem>>, vector<1x128xf32>
    %20 = vector.broadcast %19 : vector<1x128xf32> to vector<8x128xf32>
    %21 = arith.addf %18, %20 : vector<8x128xf32>
    %cst_17 = arith.constant 0.000000e+00 : f32
    %22 = vector.broadcast %cst_17 : f32 to vector<8x128xf32>
    %23 = arith.maximumf %21, %22 : vector<8x128xf32>
    %24 = arith.truncf %23 : vector<8x128xf32> to vector<8x128xbf16>
    %c0_18 = arith.constant 0 : index
    %c0_19 = arith.constant 0 : index
    %25 = vector.load %arg8[%c0_18, %c0_19] : memref<128x128xbf16, #tpu.memory_space<vmem>>, vector<128x128xbf16>
    %cst_20 = arith.constant dense<0.000000e+00> : vector<8x128xf32>
    %26 = tpu.matmul %24, %25, %cst_20 {dimension_numbers = #tpu.dot_dimension_numbers<[1], [0], [0], [1], [0, 0, 1, 1], [], []>} : vector<8x128xbf16>, vector<128x128xbf16>, vector<8x128xf32> -> vector<8x128xf32>
    %c0_21 = arith.constant 0 : index
    %c0_22 = arith.constant 0 : index
    %27 = vector.load %arg9[%c0_21, %c0_22] : memref<1x128xf32, #tpu.memory_space<vmem>>, vector<1x128xf32>
    %28 = vector.broadcast %27 : vector<1x128xf32> to vector<8x128xf32>
    %29 = arith.addf %26, %28 : vector<8x128xf32>
    %30 = vector.extract_strided_slice %29 {offsets = [0, 0], sizes = [8, 8], strides = [1, 1]} : vector<8x128xf32> to vector<8x8xf32>
    %c0_23 = arith.constant 0 : index
    %c0_24 = arith.constant 0 : index
    %31 = vector.load %arg10[%c0_23, %c0_24] : memref<8x8xf32, #tpu.memory_space<vmem>>, vector<8x8xf32>
    tpu.vector_store %arg10[%c0_23, %c0_24], %30 {strides = array<i32>} : memref<8x8xf32, #tpu.memory_space<vmem>>, vector<8x8xf32>,
    return
  }
  func.func @transform_0(%arg0: i32) -> (i32, i32) {
    %c0_i32 = arith.constant 0 : i32
    %c0_i32_0 = arith.constant 0 : i32
    return %arg0, %c0_i32 : i32, i32
  }
  func.func @transform_1(%arg0: i32) -> (i32, i32) {
    %c0_i32 = arith.constant 0 : i32
    %c0_i32_0 = arith.constant 0 : i32
    %c0_i32_1 = arith.constant 0 : i32
    return %c0_i32, %c0_i32_0 : i32, i32
  }
  func.func @transform_2(%arg0: i32) -> (i32, i32) {
    %c0_i32 = arith.constant 0 : i32
    %c0_i32_0 = arith.constant 0 : i32
    %c0_i32_1 = arith.constant 0 : i32
    return %c0_i32, %c0_i32_0 : i32, i32
  }
  func.func @transform_3(%arg0: i32) -> (i32, i32) {
    %c0_i32 = arith.constant 0 : i32
    %c0_i32_0 = arith.constant 0 : i32
    %c0_i32_1 = arith.constant 0 : i32
    return %c0_i32, %c0_i32_0 : i32, i32
  }
  func.func @transform_4(%arg0: i32) -> (i32, i32) {
    %c0_i32 = arith.constant 0 : i32
    %c0_i32_0 = arith.constant 0 : i32
    %c0_i32_1 = arith.constant 0 : i32
    return %c0_i32, %c0_i32_0 : i32, i32
  }
  func.func @transform_5(%arg0: i32) -> (i32, i32) {
    %c0_i32 = arith.constant 0 : i32
    %c0_i32_0 = arith.constant 0 : i32
    %c0_i32_1 = arith.constant 0 : i32
    return %c0_i32, %c0_i32_0 : i32, i32
  }
  func.func @transform_6(%arg0: i32) -> (i32, i32) {
    %c0_i32 = arith.constant 0 : i32
    %c0_i32_0 = arith.constant 0 : i32
    %c0_i32_1 = arith.constant 0 : i32
    return %c0_i32, %c0_i32_0 : i32, i32
  }
  func.func @transform_7(%arg0: i32) -> (i32, i32) {
    %c0_i32 = arith.constant 0 : i32
    %c0_i32_0 = arith.constant 0 : i32
    %c0_i32_1 = arith.constant 0 : i32
    return %c0_i32, %c0_i32_0 : i32, i32
  }
  func.func @transform_8(%arg0: i32) -> (i32, i32) {
    %c0_i32 = arith.constant 0 : i32
    %c0_i32_0 = arith.constant 0 : i32
    %c0_i32_1 = arith.constant 0 : i32
    return %c0_i32, %c0_i32_0 : i32, i32
  }
  func.func @transform_9(%arg0: i32) -> (i32, i32) {
    %c0_i32 = arith.constant 0 : i32
    %c0_i32_0 = arith.constant 0 : i32
    return %arg0, %c0_i32 : i32, i32
  }
}

</mosaic_0001>

<llo_original>
// kernel: neural_network_forward.1
$region0: #{neural_network_forward.1}
  #allocation0 [shape = 'u32[]', space=smem, size = 0x4, offset = 0x4, fixed_abs, tag = 'smem constant byte address 0x4 - core index']
  #allocation1 [shape = 'u32[144,128]{1,0:T(1,128)}', space=vmem, size = 0x12000, scoped, tag = 'internal scratch']
  %s0 = inlined_call_operand.vmem [shape: f32[8,8], index: 0, kind: input, shape index: {}]
  %s1 = inlined_call_operand.vmem [shape: f32[8,128], index: 1, kind: input, shape index: {}]
  %s2 = inlined_call_operand.vmem [shape: f32[1,128], index: 2, kind: input, shape index: {}]
  %s3 = inlined_call_operand.vmem [shape: bf16[128,128], index: 3, kind: input, shape index: {}]
  %s4 = inlined_call_operand.vmem [shape: f32[1,128], index: 4, kind: input, shape index: {}]
  %s5 = inlined_call_operand.vmem [shape: bf16[128,128], index: 5, kind: input, shape index: {}]
  %s6 = inlined_call_operand.vmem [shape: f32[1,128], index: 6, kind: input, shape index: {}]
  %s7 = inlined_call_operand.vmem [shape: bf16[128,128], index: 7, kind: input, shape index: {}]
  %s8 = inlined_call_operand.vmem [shape: f32[1,128], index: 8, kind: input, shape index: {}]
  %s9 = inlined_call_operand.vmem [shape: f32[8,8], index: 9, kind: output, shape index: {}]
  %s10 = sld [smem:[#allocation0]]
  $region46: #{neural_network_forward.1} parent=0
    _
  %s12 = ssub.s32 1, %s10
  %s13 = scalar_select 0, %s12, %s10
  // Predicated region
  $region2: #{neural_network_forward.1} parent=0 // pred_check
    _
  $region3: #{neural_network_forward.1} parent=0 // pred_check_branch
    %15 = sbr.rel (0) target = $region5
  $region4: #{neural_network_forward.1} parent=0 // pred_region
    _
  $region5: #{neural_network_forward.1} parent=0 // pred_fallthru
    _
  // Predicated region
  $region6: #{neural_network_forward.1} parent=0 // pred_check
    _
  $region7: #{neural_network_forward.1} parent=0 // pred_check_branch
    %17 = sbr.rel (0) target = $region9
  $region8: #{neural_network_forward.1} parent=0 // pred_region
    _
  $region9: #{neural_network_forward.1} parent=0 // pred_fallthru
    _
  // Predicated region
  $region10: #{neural_network_forward.1} parent=0 // pred_check
    _
  $region11: #{neural_network_forward.1} parent=0 // pred_check_branch
    %19 = sbr.rel (0) target = $region13
  $region12: #{neural_network_forward.1} parent=0 // pred_region
    _
  $region13: #{neural_network_forward.1} parent=0 // pred_fallthru
    _
  // Predicated region
  $region14: #{neural_network_forward.1} parent=0 // pred_check
    _
  $region15: #{neural_network_forward.1} parent=0 // pred_check_branch
    %21 = sbr.rel (0) target = $region17
  $region16: #{neural_network_forward.1} parent=0 // pred_region
    _
  $region17: #{neural_network_forward.1} parent=0 // pred_fallthru
    _
  // Predicated region
  $region18: #{neural_network_forward.1} parent=0 // pred_check
    _
  $region19: #{neural_network_forward.1} parent=0 // pred_check_branch
    %23 = sbr.rel (0) target = $region21
  $region20: #{neural_network_forward.1} parent=0 // pred_region
    _
  $region21: #{neural_network_forward.1} parent=0 // pred_fallthru
    _
  // Predicated region
  $region22: #{neural_network_forward.1} parent=0 // pred_check
    _
  $region23: #{neural_network_forward.1} parent=0 // pred_check_branch
    %25 = sbr.rel (0) target = $region25
  $region24: #{neural_network_forward.1} parent=0 // pred_region
    _
  $region25: #{neural_network_forward.1} parent=0 // pred_fallthru
    _
  // Predicated region
  $region26: #{neural_network_forward.1} parent=0 // pred_check
    _
  $region27: #{neural_network_forward.1} parent=0 // pred_check_branch
    %27 = sbr.rel (0) target = $region29
  $region28: #{neural_network_forward.1} parent=0 // pred_region
    _
  $region29: #{neural_network_forward.1} parent=0 // pred_fallthru
    _
  // Predicated region
  $region30: #{neural_network_forward.1} parent=0 // pred_check
    _
  $region31: #{neural_network_forward.1} parent=0 // pred_check_branch
    %29 = sbr.rel (0) target = $region33
  $region32: #{neural_network_forward.1} parent=0 // pred_region
    _
  $region33: #{neural_network_forward.1} parent=0 // pred_fallthru
    _
  // Predicated region
  $region34: #{neural_network_forward.1} parent=0 // pred_check
    _
  $region35: #{neural_network_forward.1} parent=0 // pred_check_branch
    %31 = sbr.rel (0) target = $region37
  $region36: #{neural_network_forward.1} parent=0 // pred_region
    _
  $region37: #{neural_network_forward.1} parent=0 // pred_fallthru
    _
  %v33 = vld [vmem:[%s0] sm:$0xff]
  %v34 = vld [vmem:[%s1] sm:$0xff]
  %v35 = vld [vmem:[%s2] sm:$0x1]
  %v37 = vlaneseq
  %v38 = vshrl.u32 %v37, 7
  %v39 = vsub.s32 0, %v38
  %v40 = vrot.slane %v35, %v39
  %vm42 = vcmask 64512
  %v44 = vsel %vm42, %v33, 0
  %46 = vmatprep.subr.mxu0 0.0
  %47 = vmatpush1.msra.mxu0 %v34
  %48 = vmatprep.subr.mxu0 0.0
  %49 = vmatpush1.msra.mxu0 0.0
  %50 = vmatprep.subr.mxu0 0.0
  %51 = vmatpush1.msra.mxu0 0.0
  %52 = vmatprep.subr.mxu0 0.0
  %53 = vmatpush1.msra.mxu0 0.0
  %54 = vmatprep.subr.mxu0 0.0
  %55 = vmatpush1.msra.mxu0 0.0
  %56 = vmatprep.subr.mxu0 0.0
  %57 = vmatpush1.msra.mxu0 0.0
  %58 = vmatprep.subr.mxu0 0.0
  %59 = vmatpush1.msra.mxu0 0.0
  %60 = vmatprep.subr.mxu0 0.0
  %61 = vmatpush1.msra.mxu0 0.0
  %62 = vmatprep.subr.mxu0 0.0
  %63 = vmatpush1.msra.mxu0 0.0
  %64 = vmatprep.subr.mxu0 0.0
  %65 = vmatpush1.msra.mxu0 0.0
  %66 = vmatprep.subr.mxu0 0.0
  %67 = vmatpush1.msra.mxu0 0.0
  %68 = vmatprep.subr.mxu0 0.0
  %69 = vmatpush1.msra.mxu0 0.0
  %70 = vmatprep.subr.mxu0 0.0
  %71 = vmatpush1.msra.mxu0 0.0
  %72 = vmatprep.subr.mxu0 0.0
  %73 = vmatpush1.msra.mxu0 0.0
  %74 = vmatprep.subr.mxu0 0.0
  %75 = vmatpush1.msra.mxu0 0.0
  %76 = vmatprep.subr.mxu0 0.0
  %77 = vmatpush1.msra.mxu0 0.0
  %78 = vmatprep.subr.mxu0 0.0
  %79 = vmatpush1.msra.mxu0 0.0
  %80 = vmatprep.subr.mxu0 0.0
  %81 = vmatpush1.msra.mxu0 0.0
  %82 = vmatprep.subr.mxu0 0.0
  %83 = vmatpush1.msra.mxu0 0.0
  %84 = vmatprep.subr.mxu0 0.0
  %85 = vmatpush1.msra.mxu0 0.0
  %86 = vmatprep.subr.mxu0 0.0
  %87 = vmatpush1.msra.mxu0 0.0
  %88 = vmatprep.subr.mxu0 0.0
  %89 = vmatpush1.msra.mxu0 0.0
  %90 = vmatprep.subr.mxu0 0.0
  %91 = vmatpush1.msra.mxu0 0.0
  %92 = vmatprep.subr.mxu0 0.0
  %93 = vmatpush1.msra.mxu0 0.0
  %94 = vmatprep.subr.mxu0 0.0
  %95 = vmatpush1.msra.mxu0 0.0
  %96 = vmatprep.subr.mxu0 0.0
  %97 = vmatpush1.msra.mxu0 0.0
  %98 = vmatprep.subr.mxu0 0.0
  %99 = vmatpush1.msra.mxu0 0.0
  %100 = vmatprep.subr.mxu0 0.0
  %101 = vmatpush1.msra.mxu0 0.0
  %102 = vmatprep.subr.mxu0 0.0
  %103 = vmatpush1.msra.mxu0 0.0
  %104 = vmatprep.subr.mxu0 0.0
  %105 = vmatpush1.msra.mxu0 0.0
  %106 = vmatprep.subr.mxu0 0.0
  %107 = vmatpush1.msra.mxu0 0.0
  %108 = vmatprep.subr.mxu0 0.0
  %109 = vmatpush1.msra.mxu0 0.0
  %110 = vmatprep.mubr.f32.mxu0 0.0
  %111 = vmatmul.mubr.f32.gmra.mrb[0].mxu0 %v44
  %v112 = vpop.f32.mrb[0].mxu0
  %v113 = vadd.f32 %v40, %v112
  %v114 = vpop.f32.mrb[0].mxu0
  %115 = vdwg.mxu0
  %v116 = vmax.f32 %v113, 0.0
  %v117 = vpack.c.bf16 %v116, %v116
  %v118 = vld [vmem:[%s3] sm:$0xf]
  %v119 = vld [vmem:[%s3 + $0x4] sm:$0xf]
  %v120 = vld [vmem:[%s3 + $0x8] sm:$0xf]
  %v121 = vld [vmem:[%s3 + $0xc] sm:$0xf]
  %v122 = vld [vmem:[%s3 + $0x10] sm:$0xf]
  %v123 = vld [vmem:[%s3 + $0x14] sm:$0xf]
  %v124 = vld [vmem:[%s3 + $0x18] sm:$0xf]
  %v125 = vld [vmem:[%s3 + $0x1c] sm:$0xf]
  %v126 = vld [vmem:[%s3 + $0x20] sm:$0xf]
  %v127 = vld [vmem:[%s3 + $0x24] sm:$0xf]
  %v128 = vld [vmem:[%s3 + $0x28] sm:$0xf]
  %v129 = vld [vmem:[%s3 + $0x2c] sm:$0xf]
  %v130 = vld [vmem:[%s3 + $0x30] sm:$0xf]
  %v131 = vld [vmem:[%s3 + $0x34] sm:$0xf]
  %v132 = vld [vmem:[%s3 + $0x38] sm:$0xf]
  %v133 = vld [vmem:[%s3 + $0x3c] sm:$0xf]
  %v134 = vld [vmem:[%s4] sm:$0x1]
  %v136 = vlaneseq
  %v137 = vshrl.u32 %v136, 7
  %v138 = vsub.s32 0, %v137
  %v139 = vrot.slane %v134, %v138
  %v157 = vunpack.c.l.b16 %v118
  %v158 = vunpack.c.l.b16 %v119
  %v159 = vunpack.c.l.b16 %v120
  %v160 = vunpack.c.l.b16 %v121
  %v161 = vunpack.c.l.b16 %v122
  %v162 = vunpack.c.l.b16 %v123
  %v163 = vunpack.c.l.b16 %v124
  %v164 = vunpack.c.l.b16 %v125
  %v165 = vunpack.c.l.b16 %v126
  %v166 = vunpack.c.l.b16 %v127
  %v167 = vunpack.c.l.b16 %v128
  %v168 = vunpack.c.l.b16 %v129
  %v169 = vunpack.c.l.b16 %v130
  %v170 = vunpack.c.l.b16 %v131
  %v171 = vunpack.c.l.b16 %v132
  %v172 = vunpack.c.l.b16 %v133
  %v173 = vpack.c.b16 %v158, %v157
  %v174 = vpack.c.b16 %v160, %v159
  %v175 = vpack.c.b16 %v162, %v161
  %v176 = vpack.c.b16 %v164, %v163
  %v177 = vpack.c.b16 %v166, %v165
  %v178 = vpack.c.b16 %v168, %v167
  %v179 = vpack.c.b16 %v170, %v169
  %v180 = vpack.c.b16 %v172, %v171
  %189 = vmatprep.subr.bf16.mxu0 0
  %190 = vmatpush1.bf16.msra.mxu0 %v173
  %191 = vmatprep.subr.bf16.mxu0 0
  %192 = vmatpush1.bf16.msra.mxu0 %v174
  %193 = vmatprep.subr.bf16.mxu0 0
  %194 = vmatpush1.bf16.msra.mxu0 %v175
  %195 = vmatprep.subr.bf16.mxu0 0
  %196 = vmatpush1.bf16.msra.mxu0 %v176
  %197 = vmatprep.subr.bf16.mxu0 0
  %198 = vmatpush1.bf16.msra.mxu0 %v177
  %199 = vmatprep.subr.bf16.mxu0 0
  %200 = vmatpush1.bf16.msra.mxu0 %v178
  %201 = vmatprep.subr.bf16.mxu0 0
  %202 = vmatpush1.bf16.msra.mxu0 %v179
  %203 = vmatprep.subr.bf16.mxu0 0
  %204 = vmatpush1.bf16.msra.mxu0 %v180
  %205 = vmatprep.subr.bf16.mxu0 0
  %206 = vmatpush1.bf16.msra.mxu0 0
  %207 = vmatprep.subr.bf16.mxu0 0
  %208 = vmatpush1.bf16.msra.mxu0 0
  %209 = vmatprep.subr.bf16.mxu0 0
  %210 = vmatpush1.bf16.msra.mxu0 0
  %211 = vmatprep.subr.bf16.mxu0 0
  %212 = vmatpush1.bf16.msra.mxu0 0
  %213 = vmatprep.subr.bf16.mxu0 0
  %214 = vmatpush1.bf16.msra.mxu0 0
  %215 = vmatprep.subr.bf16.mxu0 0
  %216 = vmatpush1.bf16.msra.mxu0 0
  %217 = vmatprep.subr.bf16.mxu0 0
  %218 = vmatpush1.bf16.msra.mxu0 0
  %219 = vmatprep.subr.bf16.mxu0 0
  %220 = vmatpush1.bf16.msra.mxu0 0
  %221 = vmatprep.mubr.bf16.mxu0 0
  %222 = vmatmul.mubr.bf16.gmra.mrb[0].mxu0 %v117
  %v223 = vpop.f32.mrb[0].mxu0
  %v224 = vadd.f32 %v139, %v223
  %v225 = vpop.f32.mrb[0].mxu0
  %v226 = vpop.f32.mrb[0].mxu0
  %v227 = vpop.f32.mrb[0].mxu0
  %228 = vdwg.mxu0
  %v229 = vmax.f32 %v224, 0.0
  %v230 = vpack.c.bf16 %v229, %v229
  %v231 = vld [vmem:[%s5] sm:$0xf]
  %v232 = vld [vmem:[%s5 + $0x4] sm:$0xf]
  %v233 = vld [vmem:[%s5 + $0x8] sm:$0xf]
  %v234 = vld [vmem:[%s5 + $0xc] sm:$0xf]
  %v235 = vld [vmem:[%s5 + $0x10] sm:$0xf]
  %v236 = vld [vmem:[%s5 + $0x14] sm:$0xf]
  %v237 = vld [vmem:[%s5 + $0x18] sm:$0xf]
  %v238 = vld [vmem:[%s5 + $0x1c] sm:$0xf]
  %v239 = vld [vmem:[%s5 + $0x20] sm:$0xf]
  %v240 = vld [vmem:[%s5 + $0x24] sm:$0xf]
  %v241 = vld [vmem:[%s5 + $0x28] sm:$0xf]
  %v242 = vld [vmem:[%s5 + $0x2c] sm:$0xf]
  %v243 = vld [vmem:[%s5 + $0x30] sm:$0xf]
  %v244 = vld [vmem:[%s5 + $0x34] sm:$0xf]
  %v245 = vld [vmem:[%s5 + $0x38] sm:$0xf]
  %v246 = vld [vmem:[%s5 + $0x3c] sm:$0xf]
  %v247 = vld [vmem:[%s6] sm:$0x1]
  %v249 = vlaneseq
  %v250 = vshrl.u32 %v249, 7
  %v251 = vsub.s32 0, %v250
  %v252 = vrot.slane %v247, %v251
  %v270 = vunpack.c.l.b16 %v231
  %v271 = vunpack.c.l.b16 %v232
  %v272 = vunpack.c.l.b16 %v233
  %v273 = vunpack.c.l.b16 %v234
  %v274 = vunpack.c.l.b16 %v235
  %v275 = vunpack.c.l.b16 %v236
  %v276 = vunpack.c.l.b16 %v237
  %v277 = vunpack.c.l.b16 %v238
  %v278 = vunpack.c.l.b16 %v239
  %v279 = vunpack.c.l.b16 %v240
  %v280 = vunpack.c.l.b16 %v241
  %v281 = vunpack.c.l.b16 %v242
  %v282 = vunpack.c.l.b16 %v243
  %v283 = vunpack.c.l.b16 %v244
  %v284 = vunpack.c.l.b16 %v245
  %v285 = vunpack.c.l.b16 %v246
  %v286 = vpack.c.b16 %v271, %v270
  %v287 = vpack.c.b16 %v273, %v272
  %v288 = vpack.c.b16 %v275, %v274
  %v289 = vpack.c.b16 %v277, %v276
  %v290 = vpack.c.b16 %v279, %v278
  %v291 = vpack.c.b16 %v281, %v280
  %v292 = vpack.c.b16 %v283, %v282
  %v293 = vpack.c.b16 %v285, %v284
  %302 = vmatprep.subr.bf16.mxu0 0
  %303 = vmatpush1.bf16.msra.mxu0 %v286
  %304 = vmatprep.subr.bf16.mxu0 0
  %305 = vmatpush1.bf16.msra.mxu0 %v287
  %306 = vmatprep.subr.bf16.mxu0 0
  %307 = vmatpush1.bf16.msra.mxu0 %v288
  %308 = vmatprep.subr.bf16.mxu0 0
  %309 = vmatpush1.bf16.msra.mxu0 %v289
  %310 = vmatprep.subr.bf16.mxu0 0
  %311 = vmatpush1.bf16.msra.mxu0 %v290
  %312 = vmatprep.subr.bf16.mxu0 0
  %313 = vmatpush1.bf16.msra.mxu0 %v291
  %314 = vmatprep.subr.bf16.mxu0 0
  %315 = vmatpush1.bf16.msra.mxu0 %v292
  %316 = vmatprep.subr.bf16.mxu0 0
  %317 = vmatpush1.bf16.msra.mxu0 %v293
  %318 = vmatprep.subr.bf16.mxu0 0
  %319 = vmatpush1.bf16.msra.mxu0 0
  %320 = vmatprep.subr.bf16.mxu0 0
  %321 = vmatpush1.bf16.msra.mxu0 0
  %322 = vmatprep.subr.bf16.mxu0 0
  %323 = vmatpush1.bf16.msra.mxu0 0
  %324 = vmatprep.subr.bf16.mxu0 0
  %325 = vmatpush1.bf16.msra.mxu0 0
  %326 = vmatprep.subr.bf16.mxu0 0
  %327 = vmatpush1.bf16.msra.mxu0 0
  %328 = vmatprep.subr.bf16.mxu0 0
  %329 = vmatpush1.bf16.msra.mxu0 0
  %330 = vmatprep.subr.bf16.mxu0 0
  %331 = vmatpush1.bf16.msra.mxu0 0
  %332 = vmatprep.subr.bf16.mxu0 0
  %333 = vmatpush1.bf16.msra.mxu0 0
  %334 = vmatprep.mubr.bf16.mxu0 0
  %335 = vmatmul.mubr.bf16.gmra.mrb[0].mxu0 %v230
  %v336 = vpop.f32.mrb[0].mxu0
  %v337 = vadd.f32 %v252, %v336
  %v338 = vpop.f32.mrb[0].mxu0
  %v339 = vpop.f32.mrb[0].mxu0
  %v340 = vpop.f32.mrb[0].mxu0
  %341 = vdwg.mxu0
  %v342 = vmax.f32 %v337, 0.0
  %v343 = vpack.c.bf16 %v342, %v342
  %v344 = vld [vmem:[%s7] sm:$0xf]
  %v345 = vld [vmem:[%s7 + $0x4] sm:$0xf]
  %v346 = vld [vmem:[%s7 + $0x8] sm:$0xf]
  %v347 = vld [vmem:[%s7 + $0xc] sm:$0xf]
  %v348 = vld [vmem:[%s7 + $0x10] sm:$0xf]
  %v349 = vld [vmem:[%s7 + $0x14] sm:$0xf]
  %v350 = vld [vmem:[%s7 + $0x18] sm:$0xf]
  %v351 = vld [vmem:[%s7 + $0x1c] sm:$0xf]
  %v352 = vld [vmem:[%s7 + $0x20] sm:$0xf]
  %v353 = vld [vmem:[%s7 + $0x24] sm:$0xf]
  %v354 = vld [vmem:[%s7 + $0x28] sm:$0xf]
  %v355 = vld [vmem:[%s7 + $0x2c] sm:$0xf]
  %v356 = vld [vmem:[%s7 + $0x30] sm:$0xf]
  %v357 = vld [vmem:[%s7 + $0x34] sm:$0xf]
  %v358 = vld [vmem:[%s7 + $0x38] sm:$0xf]
  %v359 = vld [vmem:[%s7 + $0x3c] sm:$0xf]
  %v360 = vld [vmem:[%s8] sm:$0x1]
  %v362 = vlaneseq
  %v363 = vshrl.u32 %v362, 7
  %v364 = vsub.s32 0, %v363
  %v365 = vrot.slane %v360, %v364
  %v383 = vunpack.c.l.b16 %v344
  %v384 = vunpack.c.l.b16 %v345
  %v385 = vunpack.c.l.b16 %v346
  %v386 = vunpack.c.l.b16 %v347
  %v387 = vunpack.c.l.b16 %v348
  %v388 = vunpack.c.l.b16 %v349
  %v389 = vunpack.c.l.b16 %v350
  %v390 = vunpack.c.l.b16 %v351
  %v391 = vunpack.c.l.b16 %v352
  %v392 = vunpack.c.l.b16 %v353
  %v393 = vunpack.c.l.b16 %v354
  %v394 = vunpack.c.l.b16 %v355
  %v395 = vunpack.c.l.b16 %v356
  %v396 = vunpack.c.l.b16 %v357
  %v397 = vunpack.c.l.b16 %v358
  %v398 = vunpack.c.l.b16 %v359
  %v399 = vpack.c.b16 %v384, %v383
  %v400 = vpack.c.b16 %v386, %v385
  %v401 = vpack.c.b16 %v388, %v387
  %v402 = vpack.c.b16 %v390, %v389
  %v403 = vpack.c.b16 %v392, %v391
  %v404 = vpack.c.b16 %v394, %v393
  %v405 = vpack.c.b16 %v396, %v395
  %v406 = vpack.c.b16 %v398, %v397
  %415 = vmatprep.subr.bf16.mxu0 0
  %416 = vmatpush1.bf16.msra.mxu0 %v399
  %417 = vmatprep.subr.bf16.mxu0 0
  %418 = vmatpush1.bf16.msra.mxu0 %v400
  %419 = vmatprep.subr.bf16.mxu0 0
  %420 = vmatpush1.bf16.msra.mxu0 %v401
  %421 = vmatprep.subr.bf16.mxu0 0
  %422 = vmatpush1.bf16.msra.mxu0 %v402
  %423 = vmatprep.subr.bf16.mxu0 0
  %424 = vmatpush1.bf16.msra.mxu0 %v403
  %425 = vmatprep.subr.bf16.mxu0 0
  %426 = vmatpush1.bf16.msra.mxu0 %v404
  %427 = vmatprep.subr.bf16.mxu0 0
  %428 = vmatpush1.bf16.msra.mxu0 %v405
  %429 = vmatprep.subr.bf16.mxu0 0
  %430 = vmatpush1.bf16.msra.mxu0 %v406
  %431 = vmatprep.subr.bf16.mxu0 0
  %432 = vmatpush1.bf16.msra.mxu0 0
  %433 = vmatprep.subr.bf16.mxu0 0
  %434 = vmatpush1.bf16.msra.mxu0 0
  %435 = vmatprep.subr.bf16.mxu0 0
  %436 = vmatpush1.bf16.msra.mxu0 0
  %437 = vmatprep.subr.bf16.mxu0 0
  %438 = vmatpush1.bf16.msra.mxu0 0
  %439 = vmatprep.subr.bf16.mxu0 0
  %440 = vmatpush1.bf16.msra.mxu0 0
  %441 = vmatprep.subr.bf16.mxu0 0
  %442 = vmatpush1.bf16.msra.mxu0 0
  %443 = vmatprep.subr.bf16.mxu0 0
  %444 = vmatpush1.bf16.msra.mxu0 0
  %445 = vmatprep.subr.bf16.mxu0 0
  %446 = vmatpush1.bf16.msra.mxu0 0
  %447 = vmatprep.mubr.bf16.mxu0 0
  %448 = vmatmul.mubr.bf16.gmra.mrb[0].mxu0 %v343
  %v449 = vpop.f32.mrb[0].mxu0
  %v450 = vadd.f32 %v365, %v449
  %v451 = vpop.f32.mrb[0].mxu0
  %v452 = vpop.f32.mrb[0].mxu0
  %v453 = vpop.f32.mrb[0].mxu0
  %454 = vdwg.mxu0
  %455 = vst.msk [vmem:[%s9] sm:$0xff] %vm42, %v450
  // Predicated region
  $region38: #{neural_network_forward.1} parent=0 // pred_check
    _
  $region39: #{neural_network_forward.1} parent=0 // pred_check_branch
    %457 = sbr.rel (0) target = $region41
  $region40: #{neural_network_forward.1} parent=0 // pred_region
    _
  $region41: #{neural_network_forward.1} parent=0 // pred_fallthru
    _
  // Predicated region
  $region42: #{neural_network_forward.1} parent=0 // pred_check
    _
  $region43: #{neural_network_forward.1} parent=0 // pred_check_branch
    %459 = sbr.rel (0) target = $region45
  $region44: #{neural_network_forward.1} parent=0 // pred_region
    _
  $region45: #{neural_network_forward.1} parent=0 // pred_fallthru
    _

</llo_original>
